<compile_context>
chip_gen: v5e
topology: v5e:2x2
jax: 0.10.0
libtpu: 0.0.40
codegen_flags: <defaults>
</compile_context>

<pallas_src>
import functools

import jax
import jax.numpy as jnp
from jax import lax
from jax.experimental import pallas as pl
from jax.experimental.pallas import tpu as pltpu

LANES = 128
AGE_MAX = 120.0
_INV_SQRT2 = 0.7071067811865476      # 1/sqrt(2)
_INV_SQRT_2PI = 0.3989422804014327   # 1/sqrt(2*pi)
_INV_SQRT_PI = 0.5641895835477563    # 1/sqrt(pi)


def _round_up(x, m):
    return ((x + m - 1) // m) * m


def _crps_kernel(n_ref, packed_ref, out_ref, *, use_intvl: bool, tile_rows: int):
    pid = pl.program_id(0)
    last = pl.num_programs(0) - 1

    mu = packed_ref[0]          # (tile_rows, 128)
    s = packed_ref[1]
    y_log = packed_ref[2]       # log(tte), precomputed in the wrapper
    censor = packed_ref[3]      # is_alive (binary event indicator)

    # sigma2 = exp(s)  ->  std = exp(0.5*s), 1/std = exp(-0.5*s)
    inv_std = jnp.exp(-0.5 * s)
    std = jnp.exp(0.5 * s)

    z = (y_log - mu) * inv_std                 # standardized residual
    ncdf = 0.5 * (1.0 + lax.erf(z * _INV_SQRT2))   # Phi(z)
    n2cdf = 0.5 * (1.0 + lax.erf(z))               # Phi(z*sqrt(2))
    g = jnp.exp(-0.5 * z * z) * _INV_SQRT_2PI      # npdf * std

    def f_pos(z_, ncdf_, g_, n2cdf_):
        # I_norm(mu, y) with z_ = (y - mu)/std, g_ = pdf*std
        return std * (z_ * ncdf_ * ncdf_ + 2.0 * ncdf_ * g_
                      - _INV_SQRT_PI * n2cdf_)

    def f_neg(z_, ncdf_, g_, n2cdf_):
        # I_norm(-mu, -y), using Phi(-z)=1-Phi(z), pdf(-z)=pdf(z)
        omc = 1.0 - ncdf_
        return std * (-z_ * omc * omc + 2.0 * omc * g_
                      - _INV_SQRT_PI * (1.0 - n2cdf_))

    i_y = f_pos(z, ncdf, g, n2cdf)             # I(Y)

    if use_intvl:
        # Binary censor:  I_(-T) + (1-c)*(I_(-Y) - I_(-T))  ==  I_(-y2)
        # with y2 selected BEFORE the transcendentals.
        t_log = packed_ref[4]                  # log(120 - age)
        y2_log = jnp.where(censor > 0.5, t_log, y_log)
        z2 = (y2_log - mu) * inv_std
        ncdf2 = 0.5 * (1.0 + lax.erf(z2 * _INV_SQRT2))
        n2cdf2 = 0.5 * (1.0 + lax.erf(z2))
        g2 = jnp.exp(-0.5 * z2 * z2) * _INV_SQRT_2PI
        crps = i_y + f_neg(z2, ncdf2, g2, n2cdf2)
    else:
        crps = i_y + (1.0 - censor) * f_neg(z, ncdf, g, n2cdf)

    # Full tiles: unmasked sublane reduction (no padding outside the last tile).
    @pl.when(pid != last)
    def _():
        out_ref[...] = jnp.sum(crps, axis=0, keepdims=True).reshape(1, 1, LANES)

    # Last tile: mask padded lanes against the prefetched batch size.
    @pl.when(pid == last)
    def _():
        row_ids = lax.broadcasted_iota(jnp.int32, (tile_rows, LANES), 0)
        lane_ids = lax.broadcasted_iota(jnp.int32, (tile_rows, LANES), 1)
        idx = (pid * tile_rows + row_ids) * LANES + lane_ids
        masked = jnp.where(idx < n_ref[0], crps, 0.0)
        out_ref[...] = jnp.sum(masked, axis=0, keepdims=True).reshape(1, 1, LANES)


def crps_forward(pred_params, tgts, ages, use_intvl: bool, max_tile_rows: int = 1024):
    """pred_params: (N, 2) [mu, s]; tgts: (N, 2) [tte, is_alive]; ages: (N,)."""
    n = pred_params.shape[0]
    num_planes = 5 if use_intvl else 4

    rows_min = max(_round_up(pl.cdiv(n, LANES), 8), 8)
    if rows_min <= max_tile_rows:
        # Split into 2 tiles when possible so the 2nd TensorCore on v7x has work.
        tile_rows = max(_round_up(pl.cdiv(rows_min, 2), 8), 8)
    else:
        tile_rows = max_tile_rows               # multiple of 8
    rows = _round_up(rows_min, tile_rows)
    num_tiles = rows // tile_rows
    n_pad = rows * LANES
    assert n_pad < 2 ** 31, "int32 element index would overflow"

    def pad(x, fill):
        x = x.astype(jnp.float32)
        return jnp.concatenate([x, jnp.full((n_pad - n,), fill, jnp.float32)])

    planes = [
        pad(pred_params[:, 0], 0.0),                               # mu
        pad(pred_params[:, 1], 0.0),                               # s (sigma2=exp(s))
        pad(jnp.log(tgts[:, 0].astype(jnp.float32)), 0.0),         # log(tte)
        pad(tgts[:, 1], 1.0),                                      # is_alive / censor
    ]
    if use_intvl:
        planes.append(pad(jnp.log(AGE_MAX - ages.astype(jnp.float32)), 0.0))  # log(120-age)
    packed = jnp.stack(planes).reshape(num_planes, rows, LANES)

    kernel = functools.partial(_crps_kernel, use_intvl=use_intvl,
                               tile_rows=tile_rows)
    partials = pl.pallas_call(
        kernel,
        out_shape=jax.ShapeDtypeStruct((num_tiles, 1, LANES), jnp.float32),
        grid_spec=pltpu.PrefetchScalarGridSpec(
            num_scalar_prefetch=1,
            grid=(num_tiles,),
            in_specs=[pl.BlockSpec((num_planes, tile_rows, LANES),
                                   lambda i, n_ref: (0, i, 0))],
            out_specs=pl.BlockSpec((1, 1, LANES),
                                   lambda i, n_ref: (i, 0, 0)),
        ),
        compiler_params=pltpu.CompilerParams(
            dimension_semantics=("parallel",),
            vmem_limit_bytes=32 * 1024 * 1024),
    )(jnp.array([n], jnp.int32), packed)

    # Finish the reduction outside the kernel; divide by batch size (static).
    return jnp.sum(partials) / jnp.float32(n)


def _crps_reference(pred_params, tgts, ages, use_intvl: bool):
    """Pure-JAX reference mirroring CRPS.forward / CRPS_surv_norm / I_norm."""
    mu = pred_params[:, 0].astype(jnp.float32)
    sigma2 = jnp.exp(pred_params[:, 1].astype(jnp.float32))
    std = jnp.sqrt(sigma2)
    tte, censor = tgts[:, 0].astype(jnp.float32), tgts[:, 1].astype(jnp.float32)
    y_log = jnp.log(tte)
    t_log = jnp.log(AGE_MAX - ages.astype(jnp.float32))

    def i_norm(mu_, y):
        ystd = (y - mu_) / std
        ncdf = 0.5 * (1.0 + lax.erf(ystd * _INV_SQRT2))
        npdf = jnp.exp(-0.5 * ystd ** 2) / (std / _INV_SQRT_2PI)
        n2cdf = 0.5 * (1.0 + lax.erf(ystd))
        return std * (ystd * ncdf ** 2 + 2.0 * ncdf * npdf * std
                      - _INV_SQRT_PI * n2cdf)

    i_y = i_norm(mu, y_log)
    i_neg_y = i_norm(-mu, -y_log)
    if use_intvl:
        i_neg_t = i_norm(-mu, -t_log)
        crps = i_y + i_neg_t + (1.0 - censor) * (i_neg_y - i_neg_t)
    else:
        crps = i_y + (1.0 - censor) * i_neg_y
    return jnp.mean(crps)


def _make_inputs(key, n):
    k_mu, k_s, k_tte, k_alive, k_age = jax.random.split(key, 5)
    mu = jax.random.normal(k_mu, (n,), jnp.float32) * 0.5 + 2.0
    s = jax.random.normal(k_s, (n,), jnp.float32) * 0.3          # sigma2 = exp(s)
    pred_params = jnp.stack([mu, s], axis=-1)                    # (N, 2)
    tte = jax.random.uniform(k_tte, (n,), jnp.float32, 0.5, 30.0)
    is_alive = (jax.random.uniform(k_alive, (n,)) > 0.5).astype(jnp.float32)
    tgts = jnp.stack([tte, is_alive], axis=-1)                   # (N, 2)
    ages = jax.random.uniform(k_age, (n,), jnp.float32, 20.0, 90.0)
    return pred_params, tgts, ages


if __name__ == "__main__":
    key = jax.random.PRNGKey(0)
    # N=8: single (last) tile, masked path.  N=1200: two tiles -> exercises the
    # unmasked full-tile branch and the parallel grid axis.
    for n_samples in (8, 1200):
        pred_params, tgts, ages = _make_inputs(key, n_samples)
        for use_intvl in (True, False):
            out = jax.block_until_ready(
                crps_forward(pred_params, tgts, ages, use_intvl))
            ref = _crps_reference(pred_params, tgts, ages, use_intvl)
            assert jnp.isfinite(out), "kernel produced non-finite loss"
            assert jnp.allclose(out, ref, rtol=2e-4, atol=1e-5), (
                n_samples, use_intvl, out, ref)

    print("KERNEL_OK")
</pallas_src>

<mosaic_0001>
module attributes {stable_mosaic.version = 11 : i64} {
  func.func @_crps_kernel(%arg0: i32, %arg1: memref<1xi32, #tpu.memory_space<smem>>, %arg2: memref<5x8x128xf32, #tpu.memory_space<vmem>>, %arg3: memref<1x1x128xf32, #tpu.memory_space<vmem>>) attributes {dimension_semantics = [#tpu.dimension_semantics<parallel>], iteration_bounds = array<i64: 1>, scalar_prefetch = 1 : i64, scratch_operands = 0 : i64, tpu.core_type = #tpu.core_type<tc>, window_params = [{transform_indices = @transform_0, window_bounds = array<i64: 5, 8, 128>}, {transform_indices = @transform_1, window_bounds = array<i64: 1, 1, 128>}]} {
    %c0 = arith.constant 0 : index
    %c0_0 = arith.constant 0 : index
    %c0_1 = arith.constant 0 : index
    %0 = vector.load %arg2[%c0, %c0_0, %c0_1] : memref<5x8x128xf32, #tpu.memory_space<vmem>>, vector<1x8x128xf32>
    %1 = vector.shape_cast %0 : vector<1x8x128xf32> to vector<8x128xf32>
    %c1 = arith.constant 1 : index
    %c0_2 = arith.constant 0 : index
    %c0_3 = arith.constant 0 : index
    %2 = vector.load %arg2[%c1, %c0_2, %c0_3] : memref<5x8x128xf32, #tpu.memory_space<vmem>>, vector<1x8x128xf32>
    %3 = vector.shape_cast %2 : vector<1x8x128xf32> to vector<8x128xf32>
    %c2 = arith.constant 2 : index
    %c0_4 = arith.constant 0 : index
    %c0_5 = arith.constant 0 : index
    %4 = vector.load %arg2[%c2, %c0_4, %c0_5] : memref<5x8x128xf32, #tpu.memory_space<vmem>>, vector<1x8x128xf32>
    %5 = vector.shape_cast %4 : vector<1x8x128xf32> to vector<8x128xf32>
    %c3 = arith.constant 3 : index
    %c0_6 = arith.constant 0 : index
    %c0_7 = arith.constant 0 : index
    %6 = vector.load %arg2[%c3, %c0_6, %c0_7] : memref<5x8x128xf32, #tpu.memory_space<vmem>>, vector<1x8x128xf32>
    %7 = vector.shape_cast %6 : vector<1x8x128xf32> to vector<8x128xf32>
    %cst = arith.constant -5.000000e-01 : f32
    %8 = vector.broadcast %cst : f32 to vector<8x128xf32>
    %9 = arith.mulf %8, %3 : vector<8x128xf32>
    %10 = math.exp %9 : vector<8x128xf32>
    %cst_8 = arith.constant 5.000000e-01 : f32
    %11 = vector.broadcast %cst_8 : f32 to vector<8x128xf32>
    %12 = arith.mulf %11, %3 : vector<8x128xf32>
    %13 = math.exp %12 : vector<8x128xf32>
    %14 = arith.subf %5, %1 : vector<8x128xf32>
    %15 = arith.mulf %14, %10 : vector<8x128xf32>
    %cst_9 = arith.constant 0.707106769 : f32
    %16 = vector.broadcast %cst_9 : f32 to vector<8x128xf32>
    %17 = arith.mulf %15, %16 : vector<8x128xf32>
    %18 = math.erf %17 : vector<8x128xf32>
    %cst_10 = arith.constant 1.000000e+00 : f32
    %19 = vector.broadcast %cst_10 : f32 to vector<8x128xf32>
    %20 = arith.addf %19, %18 : vector<8x128xf32>
    %cst_11 = arith.constant 5.000000e-01 : f32
    %21 = vector.broadcast %cst_11 : f32 to vector<8x128xf32>
    %22 = arith.mulf %21, %20 : vector<8x128xf32>
    %23 = math.erf %15 : vector<8x128xf32>
    %cst_12 = arith.constant 1.000000e+00 : f32
    %24 = vector.broadcast %cst_12 : f32 to vector<8x128xf32>
    %25 = arith.addf %24, %23 : vector<8x128xf32>
    %cst_13 = arith.constant 5.000000e-01 : f32
    %26 = vector.broadcast %cst_13 : f32 to vector<8x128xf32>
    %27 = arith.mulf %26, %25 : vector<8x128xf32>
    %cst_14 = arith.constant -5.000000e-01 : f32
    %28 = vector.broadcast %cst_14 : f32 to vector<8x128xf32>
    %29 = arith.mulf %28, %15 : vector<8x128xf32>
    %30 = arith.mulf %29, %15 : vector<8x128xf32>
    %31 = math.exp %30 : vector<8x128xf32>
    %cst_15 = arith.constant 0.398942292 : f32
    %32 = vector.broadcast %cst_15 : f32 to vector<8x128xf32>
    %33 = arith.mulf %31, %32 : vector<8x128xf32>
    %34 = arith.mulf %15, %22 : vector<8x128xf32>
    %35 = arith.mulf %34, %22 : vector<8x128xf32>
    %cst_16 = arith.constant 2.000000e+00 : f32
    %36 = vector.broadcast %cst_16 : f32 to vector<8x128xf32>
    %37 = arith.mulf %36, %22 : vector<8x128xf32>
    %38 = arith.mulf %37, %33 : vector<8x128xf32>
    %39 = arith.addf %35, %38 : vector<8x128xf32>
    %cst_17 = arith.constant 0.564189613 : f32
    %40 = vector.broadcast %cst_17 : f32 to vector<8x128xf32>
    %41 = arith.mulf %40, %27 : vector<8x128xf32>
    %42 = arith.subf %39, %41 : vector<8x128xf32>
    %43 = arith.mulf %13, %42 : vector<8x128xf32>
    %c4 = arith.constant 4 : index
    %c0_18 = arith.constant 0 : index
    %c0_19 = arith.constant 0 : index
    %44 = vector.load %arg2[%c4, %c0_18, %c0_19] : memref<5x8x128xf32, #tpu.memory_space<vmem>>, vector<1x8x128xf32>
    %45 = vector.shape_cast %44 : vector<1x8x128xf32> to vector<8x128xf32>
    %cst_20 = arith.constant 5.000000e-01 : f32
    %46 = vector.broadcast %cst_20 : f32 to vector<8x128xf32>
    %47 = arith.cmpf ogt, %7, %46 : vector<8x128xf32>
    %48 = arith.select %47, %45, %5 : vector<8x128xi1>, vector<8x128xf32>
    %49 = arith.subf %48, %1 : vector<8x128xf32>
    %50 = arith.mulf %49, %10 : vector<8x128xf32>
    %cst_21 = arith.constant 0.707106769 : f32
    %51 = vector.broadcast %cst_21 : f32 to vector<8x128xf32>
    %52 = arith.mulf %50, %51 : vector<8x128xf32>
    %53 = math.erf %52 : vector<8x128xf32>
    %cst_22 = arith.constant 1.000000e+00 : f32
    %54 = vector.broadcast %cst_22 : f32 to vector<8x128xf32>
    %55 = arith.addf %54, %53 : vector<8x128xf32>
    %cst_23 = arith.constant 5.000000e-01 : f32
    %56 = vector.broadcast %cst_23 : f32 to vector<8x128xf32>
    %57 = arith.mulf %56, %55 : vector<8x128xf32>
    %58 = math.erf %50 : vector<8x128xf32>
    %cst_24 = arith.constant 1.000000e+00 : f32
    %59 = vector.broadcast %cst_24 : f32 to vector<8x128xf32>
    %60 = arith.addf %59, %58 : vector<8x128xf32>
    %cst_25 = arith.constant 5.000000e-01 : f32
    %61 = vector.broadcast %cst_25 : f32 to vector<8x128xf32>
    %62 = arith.mulf %61, %60 : vector<8x128xf32>
    %cst_26 = arith.constant -5.000000e-01 : f32
    %63 = vector.broadcast %cst_26 : f32 to vector<8x128xf32>
    %64 = arith.mulf %63, %50 : vector<8x128xf32>
    %65 = arith.mulf %64, %50 : vector<8x128xf32>
    %66 = math.exp %65 : vector<8x128xf32>
    %cst_27 = arith.constant 0.398942292 : f32
    %67 = vector.broadcast %cst_27 : f32 to vector<8x128xf32>
    %68 = arith.mulf %66, %67 : vector<8x128xf32>
    %cst_28 = arith.constant 1.000000e+00 : f32
    %69 = vector.broadcast %cst_28 : f32 to vector<8x128xf32>
    %70 = arith.subf %69, %57 : vector<8x128xf32>
    %cst_29 = arith.constant 0.000000e+00 : f32
    %71 = vector.broadcast %cst_29 : f32 to vector<8x128xf32>
    %72 = arith.subf %71, %50 : vector<8x128xf32>
    %73 = arith.mulf %72, %70 : vector<8x128xf32>
    %74 = arith.mulf %73, %70 : vector<8x128xf32>
    %cst_30 = arith.constant 2.000000e+00 : f32
    %75 = vector.broadcast %cst_30 : f32 to vector<8x128xf32>
    %76 = arith.mulf %75, %70 : vector<8x128xf32>
    %77 = arith.mulf %76, %68 : vector<8x128xf32>
    %78 = arith.addf %74, %77 : vector<8x128xf32>
    %cst_31 = arith.constant 1.000000e+00 : f32
    %79 = vector.broadcast %cst_31 : f32 to vector<8x128xf32>
    %80 = arith.subf %79, %62 : vector<8x128xf32>
    %cst_32 = arith.constant 0.564189613 : f32
    %81 = vector.broadcast %cst_32 : f32 to vector<8x128xf32>
    %82 = arith.mulf %81, %80 : vector<8x128xf32>
    %83 = arith.subf %78, %82 : vector<8x128xf32>
    %84 = arith.mulf %13, %83 : vector<8x128xf32>
    %85 = arith.addf %43, %84 : vector<8x128xf32>
    %c0_i32 = arith.constant 0 : i32
    %86 = arith.cmpi ne, %arg0, %c0_i32 : i32
    %87 = arith.extui %86 : i1 to i32
    %c0_i32_33 = arith.constant 0 : i32
    %88 = arith.cmpi ne, %87, %c0_i32_33 : i32
    scf.if %88 {
      %cst_36 = arith.constant dense<0.000000e+00> : vector<128xf32>
      %92 = vector.multi_reduction <add>, %85, %cst_36 [0] : vector<8x128xf32> to vector<128xf32>
      %93 = vector.shape_cast %92 : vector<128xf32> to vector<1x128xf32>
      %94 = vector.shape_cast %93 : vector<1x128xf32> to vector<1x1x128xf32>
      %c0_37 = arith.constant 0 : index
      %c0_38 = arith.constant 0 : index
      %c0_39 = arith.constant 0 : index
      %95 = vector.load %arg3[%c0_37, %c0_38, %c0_39] : memref<1x1x128xf32, #tpu.memory_space<vmem>>, vector<1x1x128xf32>
      tpu.vector_store %arg3[%c0_37, %c0_38, %c0_39], %94 {strides = array<i32>} : memref<1x1x128xf32, #tpu.memory_space<vmem>>, vector<1x1x128xf32>,
    } else {
    }
    %c0_i32_34 = arith.constant 0 : i32
    %89 = arith.cmpi eq, %arg0, %c0_i32_34 : i32
    %90 = arith.extui %89 : i1 to i32
    %c0_i32_35 = arith.constant 0 : i32
    %91 = arith.cmpi ne, %90, %c0_i32_35 : i32
    scf.if %91 {
      %92 = tpu.iota {dimensions = array<i32: 0>} : vector<8x128xi32>
      %93 = tpu.iota {dimensions = array<i32: 1>} : vector<8x128xi32>
      %c8_i32 = arith.constant 8 : i32
      %94 = arith.muli %arg0, %c8_i32 : i32
      %95 = vector.broadcast %94 : i32 to vector<8x128xi32>
      %96 = arith.addi %95, %92 : vector<8x128xi32>
      %c128_i32 = arith.constant 128 : i32
      %97 = vector.broadcast %c128_i32 : i32 to vector<8x128xi32>
      %98 = arith.muli %96, %97 : vector<8x128xi32>
      %99 = arith.addi %98, %93 : vector<8x128xi32>
      %c0_36 = arith.constant 0 : index
      %100 = memref.load %arg1[%c0_36] : memref<1xi32, #tpu.memory_space<smem>>
      %101 = vector.broadcast %100 : i32 to vector<8x128xi32>
      %102 = arith.cmpi slt, %99, %101 : vector<8x128xi32>
      %cst_37 = arith.constant 0.000000e+00 : f32
      %103 = vector.broadcast %cst_37 : f32 to vector<8x128xf32>
      %104 = arith.select %102, %85, %103 : vector<8x128xi1>, vector<8x128xf32>
      %cst_38 = arith.constant dense<0.000000e+00> : vector<128xf32>
      %105 = vector.multi_reduction <add>, %104, %cst_38 [0] : vector<8x128xf32> to vector<128xf32>
      %106 = vector.shape_cast %105 : vector<128xf32> to vector<1x128xf32>
      %107 = vector.shape_cast %106 : vector<1x128xf32> to vector<1x1x128xf32>
      %c0_39 = arith.constant 0 : index
      %c0_40 = arith.constant 0 : index
      %c0_41 = arith.constant 0 : index
      %108 = vector.load %arg3[%c0_39, %c0_40, %c0_41] : memref<1x1x128xf32, #tpu.memory_space<vmem>>, vector<1x1x128xf32>
      tpu.vector_store %arg3[%c0_39, %c0_40, %c0_41], %107 {strides = array<i32>} : memref<1x1x128xf32, #tpu.memory_space<vmem>>, vector<1x1x128xf32>,
    } else {
    }
    return
  }
  func.func @transform_0(%arg0: i32, %arg1: memref<1xi32, #tpu.memory_space<smem>>) -> (i32, i32, i32) {
    %c0_i32 = arith.constant 0 : i32
    %c0_i32_0 = arith.constant 0 : i32
    %c0_i32_1 = arith.constant 0 : i32
    return %c0_i32, %arg0, %c0_i32_0 : i32, i32, i32
  }
  func.func @transform_1(%arg0: i32, %arg1: memref<1xi32, #tpu.memory_space<smem>>) -> (i32, i32, i32) {
    %c0_i32 = arith.constant 0 : i32
    %c0_i32_0 = arith.constant 0 : i32
    %c0_i32_1 = arith.constant 0 : i32
    return %arg0, %c0_i32, %c0_i32_0 : i32, i32, i32
  }
}

</mosaic_0001>

<llo_original>
// kernel: tpu_custom_call.1
$region0: #{tpu_custom_call.1}
  #allocation0 [shape = 'u32[]', space=smem, size = 0x4, offset = 0x4, fixed_abs, tag = 'smem constant byte address 0x4 - core index']
  #allocation1 [shape = 'u32[72,128]{1,0:T(1,128)}', space=vmem, size = 0x9000, scoped, tag = 'internal scratch']
  #allocation2 [shape = 's32[1]{0}', space=sflag, size = 0x4, scoped, tag = 'scoped memory for tpu_custom_call.1']
  #allocation3 [shape = 's32[1]{0:T(128)S(6)}', space=smem, size = 0x200, scoped, tag = 'prefetched SMEM operand 0']
  %s0 = inlined_call_operand.<no memory space> [shape: s32[1], index: 0, kind: input, shape index: {}]
  %s1 = inlined_call_operand.hbm [shape: f32[5,8,128], index: 1, kind: input, shape index: {}]
  %s2 = inlined_call_operand.hbm [shape: f32[1,1,128], index: 2, kind: output, shape index: {}]
  %s3 = sld [smem:[#allocation0]]
  $region26: #{tpu_custom_call.1} parent=0
    _
  %s5 = ssub.s32 1, %s3
  %s6 = scalar_select 0, %s5, %s3
  %7 = sst [smem:[#allocation3]] %s0
  $region1: #{tpu_custom_call.1} parent=0
    #allocation4 [shape = 'u8[20480]{0}', space=vmem, size = 0x5000, scoped, tag = 'input window, operand 1, single buffered']
    #allocation5 [shape = 's32[1]{0}', space=sflag, size = 0x4, scoped, tag = 'scoped memory for tpu_custom_call.1']
    #allocation6 [shape = 's32[1]{0}', space=sflag, size = 0x4, scoped, tag = 'scoped memory for tpu_custom_call.1']
    #allocation7 [shape = 'u8[512]{0}', space=vmem, size = 0x400, scoped, tag = 'output window, operand 0, single buffered']
    %8 = vsyncpa [#allocation5], 0
    %9 = vsyncpa [#allocation6], 0
    // Predicated region
    $region2: #{tpu_custom_call.1} parent=1 // pred_check
      _
    $region3: #{tpu_custom_call.1} parent=1 // pred_check_branch
      %11 = sbr.rel (0) target = $region5
    $region4: #{tpu_custom_call.1} parent=1 // pred_region
      %13 = vsyncadd [#allocation5], 0
      %s14 = sshll.u32 %s1, 4
      %s15 = int_to_ptr.hbm [resolvable:$true] %s14
      %s16 = sshll.u32 [#allocation4], 4
      %s17 = int_to_ptr.vmem [resolvable:$true] %s16
      %22 = dma.hbm_to_vmem [thread:$0]  %s15, 640, %s17, [#allocation5], 128, 128, 8
    $region5: #{tpu_custom_call.1} parent=1 // pred_fallthru
      _
    // Predicated region
    $region6: #{tpu_custom_call.1} parent=1 // pred_check
      _
    $region7: #{tpu_custom_call.1} parent=1 // pred_check_branch
      %24 = sbr.rel (0) target = $region9
    $region8: #{tpu_custom_call.1} parent=1 // pred_region
      %26 = dma.done [#allocation5], 640
    $region9: #{tpu_custom_call.1} parent=1 // pred_fallthru
      _
    %v27 = vld [vmem:[#allocation4] sm:$0xff]
    %s28 = scalar_lea.vmem [#allocation4], 8
    %v29 = vld [vmem:[%s28] sm:$0xff]
    %s30 = scalar_lea.vmem [#allocation4], 16
    %v31 = vld [vmem:[%s30] sm:$0xff]
    %s32 = scalar_lea.vmem [#allocation4], 24
    %v33 = vld [vmem:[%s32] sm:$0xff]
    %v34 = vmul.f32 %v29, -0.5
    %v35 = vmul.f32 %v34, 1.442695
    %v36 = vpow.pop %v35
    %v37 = vmul.f32 %v29, 0.5
    %v38 = vmul.f32 %v37, 1.442695
    %v39 = vpow.pop %v38
    %v40 = vsub.f32 %v31, %v27
    %v41 = vmul.f32 %v40, %v36
    %v42 = vmul.f32 %v41, 0.70710677
    %v43 = vmul.f32 %v42, %v42
    %v44 = vmin.f32 16.0, %v43
    %v45 = vmul.f32 %v44, 2.1237322e-06
    %v46 = vadd.f32 %v45, 0.00028619796
    %v47 = vmul.f32 %v44, %v46
    %v48 = vadd.f32 %v47, 0.0036580483
    %v49 = vmul.f32 %v44, %v48
    %v50 = vadd.f32 %v49, 0.05243302
    %v51 = vmul.f32 %v44, %v50
    %v52 = vadd.f32 %v51, 0.18741608
    %v53 = vmul.f32 %v44, %v52
    %v54 = vadd.f32 %v53, 1.1283791
    %v55 = vmul.f32 %v42, %v54
    %v56 = vmul.f32 %v44, 3.8918573e-05
    %v57 = vadd.f32 %v56, 0.001143296
    %v58 = vmul.f32 %v44, %v57
    %v59 = vadd.f32 %v58, 0.014752088
    %v60 = vmul.f32 %v44, %v59
    %v61 = vadd.f32 %v60, 0.112945676
    %v62 = vmul.f32 %v44, %v61
    %v63 = vadd.f32 %v62, 0.4994258
    %v64 = vmul.f32 %v44, %v63
    %v65 = vadd.f32 %v64, 1.0
    %v66 = vrcp.pop %v65
    %v67 = vmul.f32 %v65, %v66
    %v68 = vsub.f32 1.0, %v67
    %v69 = vmul.f32 %v66, %v68
    %v70 = vadd.f32 %v66, %v69
    %vm71 = vweird.f32 %v65
    %vm72 = vweird.f32 %v66
    %vm73 = vmor %vm71, %vm72
    %v74 = vsel %vm73, %v66, %v70
    %v75 = vand.u32 2147483647, %v65
    %vm76 = vcmp.eq.f32.partialorder %v75, 8.507059e+37
    %v77 = vand.u32 %v65, 2147483648
    %v78 = vor.u32 1.1754944e-38, %v77
    %v79 = vsel %vm76, %v78, %v74
    %v80 = vmul.f32 %v55, %v79
    %v81 = vmin.f32 %v80, 1.0
    %v82 = vmax.f32 %v81, -1.0
    %v83 = vadd.f32 %v82, 1.0
    %v84 = vmul.f32 %v83, 0.5
    %v85 = vmul.f32 %v41, %v41
    %v86 = vmin.f32 16.0, %v85
    %v87 = vmul.f32 %v86, 2.1237322e-06
    %v88 = vadd.f32 %v87, 0.00028619796
    %v89 = vmul.f32 %v86, %v88
    %v90 = vadd.f32 %v89, 0.0036580483
    %v91 = vmul.f32 %v86, %v90
    %v92 = vadd.f32 %v91, 0.05243302
    %v93 = vmul.f32 %v86, %v92
    %v94 = vadd.f32 %v93, 0.18741608
    %v95 = vmul.f32 %v86, %v94
    %v96 = vadd.f32 %v95, 1.1283791
    %v97 = vmul.f32 %v41, %v96
    %v98 = vmul.f32 %v86, 3.8918573e-05
    %v99 = vadd.f32 %v98, 0.001143296
    %v100 = vmul.f32 %v86, %v99
    %v101 = vadd.f32 %v100, 0.014752088
    %v102 = vmul.f32 %v86, %v101
    %v103 = vadd.f32 %v102, 0.112945676
    %v104 = vmul.f32 %v86, %v103
    %v105 = vadd.f32 %v104, 0.4994258
    %v106 = vmul.f32 %v86, %v105
    %v107 = vadd.f32 %v106, 1.0
    %v108 = vrcp.pop %v107
    %v109 = vmul.f32 %v107, %v108
    %v110 = vsub.f32 1.0, %v109
    %v111 = vmul.f32 %v108, %v110
    %v112 = vadd.f32 %v108, %v111
    %vm113 = vweird.f32 %v107
    %vm114 = vweird.f32 %v108
    %vm115 = vmor %vm113, %vm114
    %v116 = vsel %vm115, %v108, %v112
    %v117 = vand.u32 2147483647, %v107
    %vm118 = vcmp.eq.f32.partialorder %v117, 8.507059e+37
    %v119 = vand.u32 %v107, 2147483648
    %v120 = vor.u32 1.1754944e-38, %v119
    %v121 = vsel %vm118, %v120, %v116
    %v122 = vmul.f32 %v97, %v121
    %v123 = vmin.f32 %v122, 1.0
    %v124 = vmax.f32 %v123, -1.0
    %v125 = vadd.f32 %v124, 1.0
    %v126 = vmul.f32 %v125, 0.5
    %v127 = vmul.f32 %v41, -0.5
    %v128 = vmul.f32 %v127, %v41
    %v129 = vmul.f32 %v128, 1.442695
    %v130 = vpow.pop %v129
    %v131 = vmul.f32 %v130, 0.3989423
    %v132 = vmul.f32 %v41, %v84
    %v133 = vmul.f32 %v132, %v84
    %v134 = vmul.f32 %v84, 2.0
    %v135 = vmul.f32 %v134, %v131
    %v136 = vadd.f32 %v133, %v135
    %v137 = vmul.f32 %v126, 0.5641896
    %v138 = vsub.f32 %v136, %v137
    %v139 = vmul.f32 %v39, %v138
    %s140 = scalar_lea.vmem [#allocation4], 32
    %v141 = vld [vmem:[%s140] sm:$0xff]
    %vm142 = vcmp.gt.f32.partialorder %v33, 0.5
    %v143 = vsel %vm142, %v141, %v31
    %v144 = vsub.f32 %v143, %v27
    %v145 = vmul.f32 %v144, %v36
    %v146 = vmul.f32 %v145, 0.70710677
    %v147 = vmul.f32 %v146, %v146
    %v148 = vmin.f32 16.0, %v147
    %v149 = vmul.f32 %v148, 2.1237322e-06
    %v150 = vadd.f32 %v149, 0.00028619796
    %v151 = vmul.f32 %v148, %v150
    %v152 = vadd.f32 %v151, 0.0036580483
    %v153 = vmul.f32 %v148, %v152
    %v154 = vadd.f32 %v153, 0.05243302
    %v155 = vmul.f32 %v148, %v154
    %v156 = vadd.f32 %v155, 0.18741608
    %v157 = vmul.f32 %v148, %v156
    %v158 = vadd.f32 %v157, 1.1283791
    %v159 = vmul.f32 %v146, %v158
    %v160 = vmul.f32 %v148, 3.8918573e-05
    %v161 = vadd.f32 %v160, 0.001143296
    %v162 = vmul.f32 %v148, %v161
    %v163 = vadd.f32 %v162, 0.014752088
    %v164 = vmul.f32 %v148, %v163
    %v165 = vadd.f32 %v164, 0.112945676
    %v166 = vmul.f32 %v148, %v165
    %v167 = vadd.f32 %v166, 0.4994258
    %v168 = vmul.f32 %v148, %v167
    %v169 = vadd.f32 %v168, 1.0
    %v170 = vrcp.pop %v169
    %v171 = vmul.f32 %v169, %v170
    %v172 = vsub.f32 1.0, %v171
    %v173 = vmul.f32 %v170, %v172
    %v174 = vadd.f32 %v170, %v173
    %vm175 = vweird.f32 %v169
    %vm176 = vweird.f32 %v170
    %vm177 = vmor %vm175, %vm176
    %v178 = vsel %vm177, %v170, %v174
    %v179 = vand.u32 2147483647, %v169
    %vm180 = vcmp.eq.f32.partialorder %v179, 8.507059e+37
    %v181 = vand.u32 %v169, 2147483648
    %v182 = vor.u32 1.1754944e-38, %v181
    %v183 = vsel %vm180, %v182, %v178
    %v184 = vmul.f32 %v159, %v183
    %v185 = vmin.f32 %v184, 1.0
    %v186 = vmax.f32 %v185, -1.0
    %v187 = vadd.f32 %v186, 1.0
    %v188 = vmul.f32 %v187, 0.5
    %v189 = vmul.f32 %v145, %v145
    %v190 = vmin.f32 16.0, %v189
    %v191 = vmul.f32 %v190, 2.1237322e-06
    %v192 = vadd.f32 %v191, 0.00028619796
    %v193 = vmul.f32 %v190, %v192
    %v194 = vadd.f32 %v193, 0.0036580483
    %v195 = vmul.f32 %v190, %v194
    %v196 = vadd.f32 %v195, 0.05243302
    %v197 = vmul.f32 %v190, %v196
    %v198 = vadd.f32 %v197, 0.18741608
    %v199 = vmul.f32 %v190, %v198
    %v200 = vadd.f32 %v199, 1.1283791
    %v201 = vmul.f32 %v145, %v200
    %v202 = vmul.f32 %v190, 3.8918573e-05
    %v203 = vadd.f32 %v202, 0.001143296
    %v204 = vmul.f32 %v190, %v203
    %v205 = vadd.f32 %v204, 0.014752088
    %v206 = vmul.f32 %v190, %v205
    %v207 = vadd.f32 %v206, 0.112945676
    %v208 = vmul.f32 %v190, %v207
    %v209 = vadd.f32 %v208, 0.4994258
    %v210 = vmul.f32 %v190, %v209
    %v211 = vadd.f32 %v210, 1.0
    %v212 = vrcp.pop %v211
    %v213 = vmul.f32 %v211, %v212
    %v214 = vsub.f32 1.0, %v213
    %v215 = vmul.f32 %v212, %v214
    %v216 = vadd.f32 %v212, %v215
    %vm217 = vweird.f32 %v211
    %vm218 = vweird.f32 %v212
    %vm219 = vmor %vm217, %vm218
    %v220 = vsel %vm219, %v212, %v216
    %v221 = vand.u32 2147483647, %v211
    %vm222 = vcmp.eq.f32.partialorder %v221, 8.507059e+37
    %v223 = vand.u32 %v211, 2147483648
    %v224 = vor.u32 1.1754944e-38, %v223
    %v225 = vsel %vm222, %v224, %v220
    %v226 = vmul.f32 %v201, %v225
    %v227 = vmin.f32 %v226, 1.0
    %v228 = vmax.f32 %v227, -1.0
    %v229 = vadd.f32 %v228, 1.0
    %v230 = vmul.f32 %v229, 0.5
    %v231 = vmul.f32 %v145, -0.5
    %v232 = vmul.f32 %v231, %v145
    %v233 = vmul.f32 %v232, 1.442695
    %v234 = vpow.pop %v233
    %v235 = vmul.f32 %v234, 0.3989423
    %v236 = vsub.f32 1.0, %v188
    %v237 = vsub.f32 0.0, %v145
    %v238 = vmul.f32 %v237, %v236
    %v239 = vmul.f32 %v238, %v236
    %v240 = vmul.f32 %v236, 2.0
    %v241 = vmul.f32 %v240, %v235
    %v242 = vadd.f32 %v239, %v241
    %v243 = vsub.f32 1.0, %v230
    %v244 = vmul.f32 %v243, 0.5641896
    %v245 = vsub.f32 %v242, %v244
    %v246 = vmul.f32 %v39, %v245
    %v247 = vadd.f32 %v139, %v246
    %p248 = scmp.ne.s32.totalorder 0, 0
    // Predicated region
    $region10: #{tpu_custom_call.1} parent=1 // pred_check
      %p249 = pneg %p248
    $region11: #{tpu_custom_call.1} parent=1 // pred_check_branch
      %251 = sbr.rel (%p249) target = $region13
    $region12: #{tpu_custom_call.1} parent=1 // pred_region
      %v252 = vrot.slane %v247, 4
      %v253 = vadd.f32 %v247, %v252
      %v254 = vrot.slane %v253, 2
      %v255 = vadd.f32 %v253, %v254
      %v256 = vrot.slane %v255, 1
      %v257 = vadd.f32 %v255, %v256
      %258 = vst [vmem:[#allocation7] sm:$0x1] %v257
    $region13: #{tpu_custom_call.1} parent=1 // pred_fallthru
      _
    %p259 = scmp.eq.s32.totalorder 0, 0
    // Predicated region
    $region14: #{tpu_custom_call.1} parent=1 // pred_check
      %p260 = pneg %p259
    $region15: #{tpu_custom_call.1} parent=1 // pred_check_branch
      %262 = sbr.rel (%p260) target = $region17
    $region16: #{tpu_custom_call.1} parent=1 // pred_region
      %v263 = vlaneseq
      %v264 = vshrl.u32 %v263, 7
      %v265 = vlaneseq
      %v266 = vand.u32 %v265, 127
      %s267 = smul.u32 0, 8
      %v268 = vstv %s267
      %v269 = vadd.s32 %v268, %v264
      %v270 = vmul.u32 %v269, 128
      %v271 = vadd.s32 %v270, %v266
      %s272 = sld [smem:[#allocation3]]
      %v273 = vstv %s272
      %vm274 = vcmp.lt.s32.totalorder %v271, %v273
      %v275 = vsel %vm274, %v247, 0.0
      %v276 = vrot.slane %v275, 4
      %v277 = vadd.f32 %v275, %v276
      %v278 = vrot.slane %v277, 2
      %v279 = vadd.f32 %v277, %v278
      %v280 = vrot.slane %v279, 1
      %v281 = vadd.f32 %v279, %v280
      %282 = vst [vmem:[#allocation7] sm:$0x1] %v281
    $region17: #{tpu_custom_call.1} parent=1 // pred_fallthru
      _
    // Predicated region
    $region18: #{tpu_custom_call.1} parent=1 // pred_check
      _
    $region19: #{tpu_custom_call.1} parent=1 // pred_check_branch
      %284 = sbr.rel (0) target = $region21
    $region20: #{tpu_custom_call.1} parent=1 // pred_region
      %286 = vsyncadd [#allocation6], 0
      %s288 = sshll.u32 [#allocation7], 4
      %s289 = int_to_ptr.vmem [resolvable:$true] %s288
      %s290 = sshll.u32 %s2, 4
      %s291 = int_to_ptr.hbm [resolvable:$true] %s290
      %293 = dma.vmem_to_hbm [thread:$0]  %s289, 16, %s291, [#allocation6]
    $region21: #{tpu_custom_call.1} parent=1 // pred_fallthru
      _
    // Predicated region
    $region22: #{tpu_custom_call.1} parent=1 // pred_check
      _
    $region23: #{tpu_custom_call.1} parent=1 // pred_check_branch
      %295 = sbr.rel (0) target = $region25
    $region24: #{tpu_custom_call.1} parent=1 // pred_region
      %297 = dma.done [#allocation6], 16
    $region25: #{tpu_custom_call.1} parent=1 // pred_fallthru
      _
    %298 = vsyncpa [#allocation5], 1
    %299 = vsyncpa [#allocation6], 1

</llo_original>
